<compile_context>
chip_gen: v6e
topology: v6e:2x2x1
jax: 0.10.0
libtpu: 0.0.40
codegen_flags: <defaults>
</compile_context>

<pallas_src>
import jax
import jax.numpy as jnp
from jax.experimental import pallas as pl
from jax.experimental.pallas import tpu as pltpu


def _alpha_mask_kernel(param_ref, out_ref):
    # param_ref: (1, H*W) VMEM tile of the learnable alpha parameter
    # out_ref:   (C, H*W) VMEM tile of the lane-dense output slab
    s = jax.nn.sigmoid(param_ref[...])                 # one EUP pass, (1, HW)
    out_ref[...] = jnp.broadcast_to(s, out_ref.shape)  # in-kernel channel bcast


def alpha_mask_forward(param: jax.Array, channels: int) -> jax.Array:
    """Equivalent of AlphaMask.forward(channels).

    param: (H, W) float32
    returns: (1, channels, H, W) float32
    """
    h, w = param.shape
    hw = h * w

    # Lane-dense views: last dim hw (=256 here) is a multiple of 128 so both
    # the load and all stores are full-width.  If hw were not a multiple of
    # 128 this still compiles (full-extent block), just with a masked tail.
    param_2d = param.reshape(1, hw)

    out_2d = pl.pallas_call(
        _alpha_mask_kernel,
        out_shape=jax.ShapeDtypeStruct((channels, hw), param.dtype),
        in_specs=[pl.BlockSpec(memory_space=pltpu.MemorySpace.VMEM)],
        out_specs=pl.BlockSpec(memory_space=pltpu.MemorySpace.VMEM),
    )(param_2d)

    # Contiguous reshape to NCHW — free (same memory layout).
    return out_2d.reshape(1, channels, h, w)


if __name__ == "__main__":
    # Small shapes consistent with the module: h = w = 16, channels = 4.
    H, W = 16, 16
    CHANNELS = 4

    key = jax.random.PRNGKey(0)
    # Deterministic "randn" init, matching nn.Parameter(torch.randn(h, w)).
    param = jax.random.normal(key, (H, W), dtype=jnp.float32)

    out = alpha_mask_forward(param, CHANNELS)
    out = jax.block_until_ready(out)

    # Reference check in plain JAX.
    ref = jnp.broadcast_to(jax.nn.sigmoid(param)[None, None, :, :],
                           (1, CHANNELS, H, W))
    assert out.shape == (1, CHANNELS, H, W)
    assert out.dtype == jnp.float32
    assert bool(jnp.allclose(out, ref, atol=1e-6, rtol=1e-6))

    print("KERNEL_OK")
</pallas_src>

<mosaic_0001>
module attributes {stable_mosaic.version = 11 : i64} {
  func.func @_alpha_mask_kernel(%arg0: memref<1x256xf32, #tpu.memory_space<vmem>>, %arg1: memref<4x256xf32, #tpu.memory_space<vmem>>) attributes {dimension_semantics = [], scalar_prefetch = 0 : i64, scratch_operands = 0 : i64, tpu.core_type = #tpu.core_type<tc>} {
    %c0 = arith.constant 0 : index
    %c0_0 = arith.constant 0 : index
    %0 = vector.load %arg0[%c0, %c0_0] : memref<1x256xf32, #tpu.memory_space<vmem>>, vector<1x256xf32>
    %1 = arith.negf %0 : vector<1x256xf32>
    %2 = math.exp %1 : vector<1x256xf32>
    %cst = arith.constant 1.000000e+00 : f32
    %3 = vector.broadcast %cst : f32 to vector<1x256xf32>
    %4 = arith.addf %3, %2 : vector<1x256xf32>
    %5 = arith.divf %3, %4 : vector<1x256xf32>
    %6 = vector.shape_cast %5 : vector<1x256xf32> to vector<1x256xf32>
    %7 = vector.broadcast %6 : vector<1x256xf32> to vector<4x256xf32>
    %c0_1 = arith.constant 0 : index
    %c0_2 = arith.constant 0 : index
    %8 = vector.load %arg1[%c0_1, %c0_2] : memref<4x256xf32, #tpu.memory_space<vmem>>, vector<4x256xf32>
    tpu.vector_store %arg1[%c0_1, %c0_2], %7 {strides = array<i32>} : memref<4x256xf32, #tpu.memory_space<vmem>>, vector<4x256xf32>,
    return
  }
}

</mosaic_0001>

<llo_original>
// kernel: tpu_custom_call.1
$region0: #{tpu_custom_call.1}
  #allocation0 [shape = 'u32[]', space=smem, size = 0x4, offset = 0x4, fixed_abs, tag = 'smem constant byte address 0x4 - core index']
  #allocation1 [shape = 'u32[144,128]{1,0:T(1,128)}', space=vmem, size = 0x12000, scoped, tag = 'internal scratch']
  %s0 = inlined_call_operand.hbm [shape: f32[1,256], index: 0, kind: input, shape index: {}]
  %s1 = inlined_call_operand.hbm [shape: f32[4,256], index: 1, kind: output, shape index: {}]
  %s2 = sld [smem:[#allocation0]]
  $region18: #{tpu_custom_call.1} parent=0
    _
  %s4 = ssub.s32 1, %s2
  %s5 = scalar_select 0, %s4, %s2
  $region1: #{tpu_custom_call.1} parent=0
    #allocation2 [shape = 'u8[1024]{0}', space=vmem, size = 0x400, scoped, tag = 'input window, operand 0, single buffered']
    #allocation3 [shape = 's32[1]{0}', space=sflag, size = 0x4, scoped, tag = 'scoped memory for tpu_custom_call.1']
    #allocation4 [shape = 's32[1]{0}', space=sflag, size = 0x4, scoped, tag = 'scoped memory for tpu_custom_call.1']
    #allocation5 [shape = 'u8[4096]{0}', space=vmem, size = 0x1000, scoped, tag = 'output window, operand 0, single buffered']
    %6 = vsyncpa [#allocation3], 0
    %7 = vsyncpa [#allocation4], 0
    // Predicated region
    $region2: #{tpu_custom_call.1} parent=1 // pred_check
      _
    $region3: #{tpu_custom_call.1} parent=1 // pred_check_branch
      %9 = sbr.rel (0) target = $region5
    $region4: #{tpu_custom_call.1} parent=1 // pred_region
      %s11 = ssub.s32 32, 32
      %12 = vsyncadd [#allocation3], %s11
      %s14 = sshll.u32 [#allocation2], 4
      %s15 = int_to_ptr.vmem [resolvable:$true] %s14
      %17 = dma.hbm_to_vmem [thread:$0]  %s0, 32, %s15, [#allocation3]
    $region5: #{tpu_custom_call.1} parent=1 // pred_fallthru
      _
    // Predicated region
    $region6: #{tpu_custom_call.1} parent=1 // pred_check
      _
    $region7: #{tpu_custom_call.1} parent=1 // pred_check_branch
      %19 = sbr.rel (0) target = $region9
    $region8: #{tpu_custom_call.1} parent=1 // pred_region
      %20 = dma.done [#allocation3], 32
    $region9: #{tpu_custom_call.1} parent=1 // pred_fallthru
      _
    %v21 = vld [vmem:[#allocation2] sm:$0x3]
    %v22 = vxor.u32 %v21, 2147483648
    %v23 = vmul.f32 %v22, 1.442695
    %v24 = vpow.pop %v23
    %v25 = vadd.f32 %v24, 1.0
    %v26 = vrcp.pop %v25
    %v27 = vmul.f32 1.0, %v26
    %v29 = vlaneseq
    %v30 = vshrl.u32 %v29, 7
    %v31 = vsub.s32 0, %v30
    %v32 = vrot.slane %v27, %v31
    %v33 = vlaneseq
    %v34 = vshrl.u32 %v33, 7
    %v35 = vsub.s32 1, %v34
    %v36 = vrot.slane %v27, %v35
    %v37 = vcombine.low %v32, %v36
    %39 = vst [vmem:[#allocation5] sm:$0xff] %v37
    // Predicated region
    $region10: #{tpu_custom_call.1} parent=1 // pred_check
      _
    $region11: #{tpu_custom_call.1} parent=1 // pred_check_branch
      %41 = sbr.rel (0) target = $region13
    $region12: #{tpu_custom_call.1} parent=1 // pred_region
      %s43 = ssub.s32 128, 128
      %44 = vsyncadd [#allocation4], %s43
      %s46 = sshll.u32 [#allocation5], 4
      %s47 = int_to_ptr.vmem [resolvable:$true] %s46
      %49 = dma.vmem_to_hbm [thread:$0]  %s47, 128, %s1, [#allocation4]
    $region13: #{tpu_custom_call.1} parent=1 // pred_fallthru
      _
    // Predicated region
    $region14: #{tpu_custom_call.1} parent=1 // pred_check
      _
    $region15: #{tpu_custom_call.1} parent=1 // pred_check_branch
      %51 = sbr.rel (0) target = $region17
    $region16: #{tpu_custom_call.1} parent=1 // pred_region
      %52 = dma.done [#allocation4], 128
    $region17: #{tpu_custom_call.1} parent=1 // pred_fallthru
      _
    %53 = vsyncpa [#allocation3], 1
    %54 = vsyncpa [#allocation4], 1

</llo_original>
